<compile_context>
chip_gen: v7x
topology: tpu7x:2x2x1
jax: 0.10.0
libtpu: 0.0.40
codegen_flags: <defaults>
</compile_context>

<pallas_src>
import jax
import jax.numpy as jnp
from jax.experimental import pallas as pl
from jax.experimental.pallas import tpu as pltpu


def _round_up(x, m):
    return ((x + m - 1) // m) * m


def _largest_divisor_tile(dim, candidates):
    for c in candidates:
        if dim % c == 0:
            return c
    return dim


def _lif_kernel(z_ref, w_ref, b_ref, sv_ref, sz_ref, vd_ref, th_ref,
                zout_ref, vout_ref):
    # synapse: i = z @ W + b   (MXU matmul, bf16 operands, f32 accumulation)
    i = jnp.dot(z_ref[...], w_ref[...], preferred_element_type=jnp.float32)
    i = i + b_ref[...]                                   # (tb, tn) + (1, tn)

    # membrane update: v = state.v * v_decay * (1 - state.z) + i   (f32 VPU)
    v = sv_ref[...] * vd_ref[...] * (1.0 - sz_ref[...]) + i

    # spike: z = (v - thresh > 0).float()
    zout_ref[...] = (v - th_ref[...] > 0.0).astype(jnp.float32)
    vout_ref[...] = v


def lif_forward(z, w, b, state_v, state_z, v_decay, thresh,
                *, compute_dtype=jnp.bfloat16):
    """One LIF step.  z:(B,IN)  w:(IN,SIZE)  b/v_decay/thresh:(SIZE,)
    state_v/state_z:(B,SIZE).  Returns (z_out, (z_out, v_out))."""
    B, IN = z.shape
    SIZE = w.shape[1]

    # Lane/sublane-dense padded shapes.
    Bp = _round_up(B, 8)
    Sp = _round_up(SIZE, 128)

    # Tile sizes: biggest that divides the padded dims (bounded for VMEM).
    tb = _largest_divisor_tile(Bp, (256, 128, 64, 32, 16, 8))
    tn = _largest_divisor_tile(Sp, (512, 256, 128))

    def pad2(a, r, c):
        return jnp.pad(a, ((0, r - a.shape[0]), (0, c - a.shape[1])))

    zp = pad2(z.astype(compute_dtype), Bp, IN)
    wp = pad2(w.astype(compute_dtype), IN, Sp)
    bp = pad2(b.reshape(1, SIZE).astype(jnp.float32), 1, Sp)
    vdp = pad2(v_decay.reshape(1, SIZE).astype(jnp.float32), 1, Sp)
    thp = pad2(thresh.reshape(1, SIZE).astype(jnp.float32), 1, Sp)
    svp = pad2(state_v.astype(jnp.float32), Bp, Sp)
    szp = pad2(state_z.astype(jnp.float32), Bp, Sp)

    grid = (Bp // tb, Sp // tn)

    itemsize = jnp.dtype(compute_dtype).itemsize
    per_step_bytes = (tb * IN * itemsize + IN * tn * itemsize   # z tile, W tile
                      + 3 * tn * 4                              # b, v_decay, thresh
                      + 2 * tb * tn * 4                         # state_v, state_z
                      + 2 * tb * tn * 4)                        # z_out, v_out
    vmem_limit = int(min(2 * per_step_bytes + (4 << 20), 64 << 20))

    nbytes = lambda a: a.size * a.dtype.itemsize
    cost = pl.CostEstimate(
        flops=int(2 * Bp * IN * Sp + 5 * Bp * Sp),
        transcendentals=0,
        bytes_accessed=int(sum(nbytes(a) for a in (zp, wp, bp, vdp, thp, svp, szp))
                           + 2 * Bp * Sp * 4))

    z_out, v_out = pl.pallas_call(
        _lif_kernel,
        out_shape=(
            jax.ShapeDtypeStruct((Bp, Sp), jnp.float32),
            jax.ShapeDtypeStruct((Bp, Sp), jnp.float32),
        ),
        grid=grid,
        in_specs=[
            pl.BlockSpec((tb, IN), lambda i, j: (i, 0)),    # z    (full K)
            pl.BlockSpec((IN, tn), lambda i, j: (0, j)),    # W    (resident over batch)
            pl.BlockSpec((1, tn), lambda i, j: (0, j)),     # b
            pl.BlockSpec((tb, tn), lambda i, j: (i, j)),    # state.v
            pl.BlockSpec((tb, tn), lambda i, j: (i, j)),    # state.z
            pl.BlockSpec((1, tn), lambda i, j: (0, j)),     # v_decay
            pl.BlockSpec((1, tn), lambda i, j: (0, j)),     # thresh
        ],
        out_specs=(
            pl.BlockSpec((tb, tn), lambda i, j: (i, j)),    # z_out
            pl.BlockSpec((tb, tn), lambda i, j: (i, j)),    # v_out
        ),
        # In-place recurrent state update: state.z -> z_out, state.v -> v_out.
        input_output_aliases={4: 0, 3: 1},
        compiler_params=pltpu.CompilerParams(
            dimension_semantics=("parallel", "parallel"),
            vmem_limit_bytes=vmem_limit),
        cost_estimate=cost,
    )(zp, wp, bp, svp, szp, vdp, thp)

    z_out = z_out[:B, :SIZE]
    v_out = v_out[:B, :SIZE]
    # Mirrors PyTorch return: (z, LIFState(z, v))
    return z_out, (z_out, v_out)


if __name__ == "__main__":
    key = jax.random.PRNGKey(0)
    kz, kw, kb, kv, ks, kd, kt = jax.random.split(key, 7)

    B, IN, SIZE = 8, 16, 32  # batch, synapse input features, LIF size

    # Input spikes (binary, like upstream layer output).
    z_in = (jax.random.uniform(kz, (B, IN)) > 0.5).astype(jnp.float32)

    # Deterministic synapse (nn.Linear(IN, SIZE)) parameters.
    bound = 1.0 / jnp.sqrt(IN)
    w = jax.random.uniform(kw, (IN, SIZE), minval=-bound, maxval=bound,
                           dtype=jnp.float32)
    b = jax.random.uniform(kb, (SIZE,), minval=-bound, maxval=bound,
                           dtype=jnp.float32)

    # LIF learnable parameters, matching torch init ranges.
    v_decay = jax.random.uniform(kd, (SIZE,), minval=0.3, maxval=0.85,
                                 dtype=jnp.float32)
    thresh = jax.random.uniform(kt, (SIZE,), minval=0.7, maxval=0.999,
                                dtype=jnp.float32)

    # Non-trivial previous state (state=None case would be zeros_like(synapse(z))).
    state_v = jax.random.uniform(kv, (B, SIZE), dtype=jnp.float32)
    state_z = (jax.random.uniform(ks, (B, SIZE)) > 0.5).astype(jnp.float32)

    z_out, (z_state, v_state) = lif_forward(z_in, w, b, state_v, state_z,
                                            v_decay, thresh)
    jax.block_until_ready((z_out, z_state, v_state))

    # Pure-JAX reference with the same bf16-operand / f32-accumulate matmul
    # numerics as the kernel.
    i_ref = jnp.dot(z_in.astype(jnp.bfloat16), w.astype(jnp.bfloat16),
                    preferred_element_type=jnp.float32) + b[None, :]
    v_ref = state_v * v_decay[None, :] * (1.0 - state_z) + i_ref
    z_ref = (v_ref - thresh[None, :] > 0.0).astype(jnp.float32)

    assert jnp.allclose(v_state, v_ref, atol=1e-5), "v mismatch"
    assert jnp.array_equal(z_out, z_ref), "z mismatch"
    assert jnp.array_equal(z_state, z_out), "state z mismatch"

    print("KERNEL_OK")
</pallas_src>

<mosaic_0001>
module attributes {stable_mosaic.version = 11 : i64} {
  func.func @_lif_kernel(%arg0: i32, %arg1: i32, %arg2: memref<8x16xbf16, #tpu.memory_space<vmem>>, %arg3: memref<16x128xbf16, #tpu.memory_space<vmem>>, %arg4: memref<1x128xf32, #tpu.memory_space<vmem>>, %arg5: memref<8x128xf32, #tpu.memory_space<vmem>>, %arg6: memref<8x128xf32, #tpu.memory_space<vmem>>, %arg7: memref<1x128xf32, #tpu.memory_space<vmem>>, %arg8: memref<1x128xf32, #tpu.memory_space<vmem>>, %arg9: memref<8x128xf32, #tpu.memory_space<vmem>>, %arg10: memref<8x128xf32, #tpu.memory_space<vmem>>) attributes {dimension_semantics = [#tpu.dimension_semantics<parallel>, #tpu.dimension_semantics<parallel>], iteration_bounds = array<i64: 1, 1>, scalar_prefetch = 0 : i64, scratch_operands = 0 : i64, tpu.core_type = #tpu.core_type<tc>, window_params = [{transform_indices = @transform_0, window_bounds = array<i64: 8, 16>}, {transform_indices = @transform_1, window_bounds = array<i64: 16, 128>}, {transform_indices = @transform_2, window_bounds = array<i64: 1, 128>}, {transform_indices = @transform_3, window_bounds = array<i64: 8, 128>}, {transform_indices = @transform_4, window_bounds = array<i64: 8, 128>}, {transform_indices = @transform_5, window_bounds = array<i64: 1, 128>}, {transform_indices = @transform_6, window_bounds = array<i64: 1, 128>}, {transform_indices = @transform_7, window_bounds = array<i64: 8, 128>}, {transform_indices = @transform_8, window_bounds = array<i64: 8, 128>}]} {
    %c0 = arith.constant 0 : index
    %c0_0 = arith.constant 0 : index
    %0 = vector.load %arg2[%c0, %c0_0] : memref<8x16xbf16, #tpu.memory_space<vmem>>, vector<8x16xbf16>
    %c0_1 = arith.constant 0 : index
    %c0_2 = arith.constant 0 : index
    %1 = vector.load %arg3[%c0_1, %c0_2] : memref<16x128xbf16, #tpu.memory_space<vmem>>, vector<16x128xbf16>
    %cst = arith.constant dense<0.000000e+00> : vector<8x128xf32>
    %2 = tpu.matmul %0, %1, %cst {dimension_numbers = #tpu.dot_dimension_numbers<[1], [0], [0], [1], [0, 0, 1, 1], [], []>} : vector<8x16xbf16>, vector<16x128xbf16>, vector<8x128xf32> -> vector<8x128xf32>
    %c0_3 = arith.constant 0 : index
    %c0_4 = arith.constant 0 : index
    %3 = vector.load %arg4[%c0_3, %c0_4] : memref<1x128xf32, #tpu.memory_space<vmem>>, vector<1x128xf32>
    %4 = vector.broadcast %3 : vector<1x128xf32> to vector<8x128xf32>
    %5 = arith.addf %2, %4 : vector<8x128xf32>
    %c0_5 = arith.constant 0 : index
    %c0_6 = arith.constant 0 : index
    %6 = vector.load %arg5[%c0_5, %c0_6] : memref<8x128xf32, #tpu.memory_space<vmem>>, vector<8x128xf32>
    %c0_7 = arith.constant 0 : index
    %c0_8 = arith.constant 0 : index
    %7 = vector.load %arg7[%c0_7, %c0_8] : memref<1x128xf32, #tpu.memory_space<vmem>>, vector<1x128xf32>
    %8 = vector.broadcast %7 : vector<1x128xf32> to vector<8x128xf32>
    %9 = arith.mulf %6, %8 : vector<8x128xf32>
    %c0_9 = arith.constant 0 : index
    %c0_10 = arith.constant 0 : index
    %10 = vector.load %arg6[%c0_9, %c0_10] : memref<8x128xf32, #tpu.memory_space<vmem>>, vector<8x128xf32>
    %cst_11 = arith.constant 1.000000e+00 : f32
    %11 = vector.broadcast %cst_11 : f32 to vector<8x128xf32>
    %12 = arith.subf %11, %10 : vector<8x128xf32>
    %13 = arith.mulf %9, %12 : vector<8x128xf32>
    %14 = arith.addf %13, %5 : vector<8x128xf32>
    %c0_12 = arith.constant 0 : index
    %c0_13 = arith.constant 0 : index
    %15 = vector.load %arg8[%c0_12, %c0_13] : memref<1x128xf32, #tpu.memory_space<vmem>>, vector<1x128xf32>
    %16 = vector.broadcast %15 : vector<1x128xf32> to vector<8x128xf32>
    %17 = arith.subf %14, %16 : vector<8x128xf32>
    %cst_14 = arith.constant 0.000000e+00 : f32
    %18 = vector.broadcast %cst_14 : f32 to vector<8x128xf32>
    %19 = arith.cmpf ogt, %17, %18 : vector<8x128xf32>
    %20 = arith.extui %19 : vector<8x128xi1> to vector<8x128xi32>
    %21 = arith.sitofp %20 : vector<8x128xi32> to vector<8x128xf32>
    %c0_15 = arith.constant 0 : index
    %c0_16 = arith.constant 0 : index
    %22 = vector.load %arg9[%c0_15, %c0_16] : memref<8x128xf32, #tpu.memory_space<vmem>>, vector<8x128xf32>
    tpu.vector_store %arg9[%c0_15, %c0_16], %21 {strides = array<i32>} : memref<8x128xf32, #tpu.memory_space<vmem>>, vector<8x128xf32>,
    %c0_17 = arith.constant 0 : index
    %c0_18 = arith.constant 0 : index
    %23 = vector.load %arg10[%c0_17, %c0_18] : memref<8x128xf32, #tpu.memory_space<vmem>>, vector<8x128xf32>
    tpu.vector_store %arg10[%c0_17, %c0_18], %14 {strides = array<i32>} : memref<8x128xf32, #tpu.memory_space<vmem>>, vector<8x128xf32>,
    return
  }
  func.func @transform_0(%arg0: i32, %arg1: i32) -> (i32, i32) {
    %c0_i32 = arith.constant 0 : i32
    %c0_i32_0 = arith.constant 0 : i32
    return %arg0, %c0_i32 : i32, i32
  }
  func.func @transform_1(%arg0: i32, %arg1: i32) -> (i32, i32) {
    %c0_i32 = arith.constant 0 : i32
    %c0_i32_0 = arith.constant 0 : i32
    return %c0_i32, %arg1 : i32, i32
  }
  func.func @transform_2(%arg0: i32, %arg1: i32) -> (i32, i32) {
    %c0_i32 = arith.constant 0 : i32
    %c0_i32_0 = arith.constant 0 : i32
    return %c0_i32, %arg1 : i32, i32
  }
  func.func @transform_3(%arg0: i32, %arg1: i32) -> (i32, i32) {
    %c0_i32 = arith.constant 0 : i32
    return %arg0, %arg1 : i32, i32
  }
  func.func @transform_4(%arg0: i32, %arg1: i32) -> (i32, i32) {
    %c0_i32 = arith.constant 0 : i32
    return %arg0, %arg1 : i32, i32
  }
  func.func @transform_5(%arg0: i32, %arg1: i32) -> (i32, i32) {
    %c0_i32 = arith.constant 0 : i32
    %c0_i32_0 = arith.constant 0 : i32
    return %c0_i32, %arg1 : i32, i32
  }
  func.func @transform_6(%arg0: i32, %arg1: i32) -> (i32, i32) {
    %c0_i32 = arith.constant 0 : i32
    %c0_i32_0 = arith.constant 0 : i32
    return %c0_i32, %arg1 : i32, i32
  }
  func.func @transform_7(%arg0: i32, %arg1: i32) -> (i32, i32) {
    %c0_i32 = arith.constant 0 : i32
    return %arg0, %arg1 : i32, i32
  }
  func.func @transform_8(%arg0: i32, %arg1: i32) -> (i32, i32) {
    %c0_i32 = arith.constant 0 : i32
    return %arg0, %arg1 : i32, i32
  }
}

</mosaic_0001>

<llo_original>
// kernel: tpu_custom_call.1
$region0: #{tpu_custom_call.1}
  #allocation0 [shape = 'u32[]', space=smem, size = 0x4, offset = 0x4, fixed_abs, tag = 'smem constant byte address 0x4 - core index']
  #allocation1 [shape = 'u32[144,128]{1,0:T(1,128)}', space=vmem, size = 0x12000, scoped, tag = 'internal scratch']
  %s0 = inlined_call_operand.vmem [shape: bf16[8,16], index: 0, kind: input, shape index: {}]
  %s1 = inlined_call_operand.vmem [shape: bf16[16,128], index: 1, kind: input, shape index: {}]
  %s2 = inlined_call_operand.vmem [shape: f32[1,128], index: 2, kind: input, shape index: {}]
  %s3 = inlined_call_operand.hbm [shape: f32[8,128], index: 3, kind: input, shape index: {}, may-alias: {3,8}]
  %s4 = inlined_call_operand.hbm [shape: f32[8,128], index: 4, kind: input, shape index: {}, may-alias: {4,7}]
  %s5 = inlined_call_operand.vmem [shape: f32[1,128], index: 5, kind: input, shape index: {}]
  %s6 = inlined_call_operand.vmem [shape: f32[1,128], index: 6, kind: input, shape index: {}]
  %s7 = inlined_call_operand.hbm [shape: f32[8,128], index: 7, kind: output, shape index: {0}, may-alias: {4,7}]
  %s8 = inlined_call_operand.hbm [shape: f32[8,128], index: 8, kind: output, shape index: {1}, may-alias: {3,8}]
  %9 = xla_tuple %s7, %s8
  %s10 = sld [smem:[#allocation0]]
  $region54: #{tpu_custom_call.1} parent=0
    _
  %s12 = ssub.s32 1, %s10
  %s13 = scalar_select 0, %s12, %s10
  $region1: #{tpu_custom_call.1} parent=0
    #allocation2 [shape = 'u8[4096]{0}', space=vmem, size = 0x1000, scoped, tag = 'input window, operand 3, single buffered']
    #allocation3 [shape = 's32[1]{0}', space=sflag, size = 0x4, scoped, tag = 'scoped memory for tpu_custom_call.1']
    #allocation4 [shape = 's32[1]{0}', space=sflag, size = 0x4, scoped, tag = 'scoped memory for tpu_custom_call.1']
    #allocation5 [shape = 'u8[4096]{0}', space=vmem, size = 0x1000, scoped, tag = 'input window, operand 4, single buffered']
    #allocation6 [shape = 's32[1]{0}', space=sflag, size = 0x4, scoped, tag = 'scoped memory for tpu_custom_call.1']
    #allocation7 [shape = 'u8[4096]{0}', space=vmem, size = 0x1000, scoped, tag = 'output window, operand 0, single buffered']
    #allocation8 [shape = 'u8[4096]{0}', space=vmem, size = 0x1000, scoped, tag = 'output window, operand 1, single buffered']
    #allocation9 [shape = 's32[1]{0}', space=sflag, size = 0x4, scoped, tag = 'scoped memory for tpu_custom_call.1']
    %14 = vsyncpa [#allocation3], 0
    %15 = vsyncpa [#allocation6], 0
    %16 = vsyncpa [#allocation4], 0
    %17 = vsyncpa [#allocation9], 0
    // Predicated region
    $region2: #{tpu_custom_call.1} parent=1 // pred_check
      _
    $region3: #{tpu_custom_call.1} parent=1 // pred_check_branch
      %19 = sbr.rel (0) target = $region5
    $region4: #{tpu_custom_call.1} parent=1 // pred_region
      _
    $region5: #{tpu_custom_call.1} parent=1 // pred_fallthru
      _
    // Predicated region
    $region6: #{tpu_custom_call.1} parent=1 // pred_check
      _
    $region7: #{tpu_custom_call.1} parent=1 // pred_check_branch
      %21 = sbr.rel (0) target = $region9
    $region8: #{tpu_custom_call.1} parent=1 // pred_region
      _
    $region9: #{tpu_custom_call.1} parent=1 // pred_fallthru
      _
    // Predicated region
    $region10: #{tpu_custom_call.1} parent=1 // pred_check
      _
    $region11: #{tpu_custom_call.1} parent=1 // pred_check_branch
      %23 = sbr.rel (0) target = $region13
    $region12: #{tpu_custom_call.1} parent=1 // pred_region
      _
    $region13: #{tpu_custom_call.1} parent=1 // pred_fallthru
      _
    // Predicated region
    $region14: #{tpu_custom_call.1} parent=1 // pred_check
      _
    $region15: #{tpu_custom_call.1} parent=1 // pred_check_branch
      %25 = sbr.rel (0) target = $region17
    $region16: #{tpu_custom_call.1} parent=1 // pred_region
      %s27 = ssub.s32 128, 128
      %28 = vsyncadd [#allocation3], %s27
      %s30 = sshll.u32 [#allocation2], 4
      %s31 = int_to_ptr.vmem [resolvable:$true] %s30
      %33 = dma.hbm_to_vmem [thread:$0]  %s3, 128, %s31, [#allocation3]
    $region17: #{tpu_custom_call.1} parent=1 // pred_fallthru
      _
    // Predicated region
    $region18: #{tpu_custom_call.1} parent=1 // pred_check
      _
    $region19: #{tpu_custom_call.1} parent=1 // pred_check_branch
      %35 = sbr.rel (0) target = $region21
    $region20: #{tpu_custom_call.1} parent=1 // pred_region
      %s37 = ssub.s32 128, 128
      %38 = vsyncadd [#allocation6], %s37
      %s40 = sshll.u32 [#allocation5], 4
      %s41 = int_to_ptr.vmem [resolvable:$true] %s40
      %43 = dma.hbm_to_vmem [thread:$0]  %s4, 128, %s41, [#allocation6]
    $region21: #{tpu_custom_call.1} parent=1 // pred_fallthru
      _
    // Predicated region
    $region22: #{tpu_custom_call.1} parent=1 // pred_check
      _
    $region23: #{tpu_custom_call.1} parent=1 // pred_check_branch
      %45 = sbr.rel (0) target = $region25
    $region24: #{tpu_custom_call.1} parent=1 // pred_region
      _
    $region25: #{tpu_custom_call.1} parent=1 // pred_fallthru
      _
    // Predicated region
    $region26: #{tpu_custom_call.1} parent=1 // pred_check
      _
    $region27: #{tpu_custom_call.1} parent=1 // pred_check_branch
      %47 = sbr.rel (0) target = $region29
    $region28: #{tpu_custom_call.1} parent=1 // pred_region
      _
    $region29: #{tpu_custom_call.1} parent=1 // pred_fallthru
      _
    // Predicated region
    $region30: #{tpu_custom_call.1} parent=1 // pred_check
      _
    $region31: #{tpu_custom_call.1} parent=1 // pred_check_branch
      %49 = sbr.rel (0) target = $region33
    $region32: #{tpu_custom_call.1} parent=1 // pred_region
      %50 = dma.done [#allocation3], 128
    $region33: #{tpu_custom_call.1} parent=1 // pred_fallthru
      _
    // Predicated region
    $region34: #{tpu_custom_call.1} parent=1 // pred_check
      _
    $region35: #{tpu_custom_call.1} parent=1 // pred_check_branch
      %52 = sbr.rel (0) target = $region37
    $region36: #{tpu_custom_call.1} parent=1 // pred_region
      %53 = dma.done [#allocation6], 128
    $region37: #{tpu_custom_call.1} parent=1 // pred_fallthru
      _
    %v55 = vld [vmem:[%s0] sm:$0xf]
    %v56 = vld [vmem:[%s1] sm:$0xf]
    %v57 = vld [vmem:[%s1 + $0x4] sm:$0xf]
    %v58 = vld [vmem:[%s2] sm:$0x1]
    %v60 = vlaneseq
    %v61 = vshrl.u32 %v60, 7
    %v62 = vsub.s32 0, %v61
    %v63 = vrot.slane %v58, %v62
    %v67 = vunpack.c.l.b16 %v56
    %v68 = vunpack.c.l.b16 %v57
    %v69 = vpack.c.b16 %v68, %v67
    %vm71 = vcmask 130048
    %v73 = vsel %vm71, %v55, 0
    %75 = vmatprep.subr.bf16.mxu0 0
    %76 = vmatpush1.bf16.msra.mxu0 %v69
    %77 = vmatprep.subr.bf16.mxu0 0
    %78 = vmatpush1.bf16.msra.mxu0 0
    %79 = vmatprep.subr.bf16.mxu0 0
    %80 = vmatpush1.bf16.msra.mxu0 0
    %81 = vmatprep.subr.bf16.mxu0 0
    %82 = vmatpush1.bf16.msra.mxu0 0
    %83 = vmatprep.subr.bf16.mxu0 0
    %84 = vmatpush1.bf16.msra.mxu0 0
    %85 = vmatprep.subr.bf16.mxu0 0
    %86 = vmatpush1.bf16.msra.mxu0 0
    %87 = vmatprep.subr.bf16.mxu0 0
    %88 = vmatpush1.bf16.msra.mxu0 0
    %89 = vmatprep.subr.bf16.mxu0 0
    %90 = vmatpush1.bf16.msra.mxu0 0
    %91 = vmatprep.subr.bf16.mxu0 0
    %92 = vmatpush1.bf16.msra.mxu0 0
    %93 = vmatprep.subr.bf16.mxu0 0
    %94 = vmatpush1.bf16.msra.mxu0 0
    %95 = vmatprep.subr.bf16.mxu0 0
    %96 = vmatpush1.bf16.msra.mxu0 0
    %97 = vmatprep.subr.bf16.mxu0 0
    %98 = vmatpush1.bf16.msra.mxu0 0
    %99 = vmatprep.subr.bf16.mxu0 0
    %100 = vmatpush1.bf16.msra.mxu0 0
    %101 = vmatprep.subr.bf16.mxu0 0
    %102 = vmatpush1.bf16.msra.mxu0 0
    %103 = vmatprep.subr.bf16.mxu0 0
    %104 = vmatpush1.bf16.msra.mxu0 0
    %105 = vmatprep.subr.bf16.mxu0 0
    %106 = vmatpush1.bf16.msra.mxu0 0
    %107 = vmatprep.mubr.bf16.mxu0 0
    %108 = vmatmul.mubr.bf16.gmra.mrb[0].mxu0 %v73
    %v109 = vpop.f32.mrb[0].mxu0
    %v110 = vadd.f32 %v63, %v109
    %v111 = vpop.f32.mrb[0].mxu0
    %v112 = vpop.f32.mrb[0].mxu0
    %v113 = vpop.f32.mrb[0].mxu0
    %114 = vdwg.mxu0
    %v115 = vld [vmem:[#allocation2] sm:$0xff]
    %v116 = vld [vmem:[%s5] sm:$0x1]
    %v118 = vlaneseq
    %v119 = vshrl.u32 %v118, 7
    %v120 = vsub.s32 0, %v119
    %v121 = vrot.slane %v116, %v120
    %v123 = vmul.f32 %v115, %v121
    %v124 = vld [vmem:[#allocation5] sm:$0xff]
    %v125 = vsub.f32 1.0, %v124
    %v126 = vmul.f32 %v123, %v125
    %v127 = vadd.f32 %v126, %v110
    %v128 = vld [vmem:[%s6] sm:$0x1]
    %v130 = vlaneseq
    %v131 = vshrl.u32 %v130, 7
    %v132 = vsub.s32 0, %v131
    %v133 = vrot.slane %v128, %v132
    %v135 = vsub.f32 %v127, %v133
    %vm136 = vcmp.gt.f32.partialorder %v135, 0.0
    %v137 = vsel %vm136, 1, 0
    %v138 = vcvt.s32.f32 %v137
    %139 = vst [vmem:[#allocation7] sm:$0xff] %v138
    %140 = vst [vmem:[#allocation8] sm:$0xff] %v127
    // Predicated region
    $region38: #{tpu_custom_call.1} parent=1 // pred_check
      _
    $region39: #{tpu_custom_call.1} parent=1 // pred_check_branch
      %142 = sbr.rel (0) target = $region41
    $region40: #{tpu_custom_call.1} parent=1 // pred_region
      %s144 = ssub.s32 128, 128
      %145 = vsyncadd [#allocation4], %s144
      %s147 = sshll.u32 [#allocation7], 4
      %s148 = int_to_ptr.vmem [resolvable:$true] %s147
      %150 = dma.vmem_to_hbm [thread:$0]  %s148, 128, %s7, [#allocation4]
    $region41: #{tpu_custom_call.1} parent=1 // pred_fallthru
      _
    // Predicated region
    $region42: #{tpu_custom_call.1} parent=1 // pred_check
      _
    $region43: #{tpu_custom_call.1} parent=1 // pred_check_branch
      %152 = sbr.rel (0) target = $region45
    $region44: #{tpu_custom_call.1} parent=1 // pred_region
      %s154 = ssub.s32 128, 128
      %155 = vsyncadd [#allocation9], %s154
      %s157 = sshll.u32 [#allocation8], 4
      %s158 = int_to_ptr.vmem [resolvable:$true] %s157
      %160 = dma.vmem_to_hbm [thread:$0]  %s158, 128, %s8, [#allocation9]
    $region45: #{tpu_custom_call.1} parent=1 // pred_fallthru
      _
    // Predicated region
    $region46: #{tpu_custom_call.1} parent=1 // pred_check
      _
    $region47: #{tpu_custom_call.1} parent=1 // pred_check_branch
      %162 = sbr.rel (0) target = $region49
    $region48: #{tpu_custom_call.1} parent=1 // pred_region
      %163 = dma.done [#allocation4], 128
    $region49: #{tpu_custom_call.1} parent=1 // pred_fallthru
      _
    // Predicated region
    $region50: #{tpu_custom_call.1} parent=1 // pred_check
      _
    $region51: #{tpu_custom_call.1} parent=1 // pred_check_branch
      %165 = sbr.rel (0) target = $region53
    $region52: #{tpu_custom_call.1} parent=1 // pred_region
      %166 = dma.done [#allocation9], 128
    $region53: #{tpu_custom_call.1} parent=1 // pred_fallthru
      _
    %167 = vsyncpa [#allocation3], 1
    %168 = vsyncpa [#allocation6], 1
    %169 = vsyncpa [#allocation4], 1
    %170 = vsyncpa [#allocation9], 1

</llo_original>
